<compile_context>
chip_gen: v7x
topology: tpu7x:2x2x1
jax: 0.10.0
libtpu: 0.0.40
codegen_flags: <defaults>
</compile_context>

<pallas_src>
import functools

import jax
import jax.numpy as jnp
from jax.experimental import pallas as pl
from jax.experimental.pallas import tpu as pltpu


def _round_up(x, m):
    return ((x + m - 1) // m) * m


def _maybe_cast(x, dtype):
    return x if x.dtype == jnp.dtype(dtype) else x.astype(dtype)


def _pooler_rank_score(x_ref, wp_ref, bp_ref, wr_ref, br_ref, *, tanh_dtype):
    # BertPooler: dense (bf16 MXU, f32 accumulate) -> tanh.
    z = (jnp.dot(x_ref[...], wp_ref[...], preferred_element_type=jnp.float32)
         + bp_ref[...])                                               # (bt, H) f32
    if jnp.dtype(tanh_dtype) != jnp.dtype(jnp.float32):
        pooled = jnp.tanh(z.astype(tanh_dtype)).astype(jnp.float32)   # bf16 EUP path
    else:
        pooled = jnp.tanh(z)
    # rank head Linear(H, 1) as VPU multiply + lane reduction (no N=1 MXU op).
    score = jnp.sum(pooled * wr_ref[...], axis=-1, keepdims=True) + br_ref[...]
    return score                                                      # (bt, 1) f32


def _infer_kernel(x_ref, wp_ref, bp_ref, wr_ref, br_ref, score_ref, *, tanh_dtype):
    score = _pooler_rank_score(x_ref, wp_ref, bp_ref, wr_ref, br_ref,
                               tanh_dtype=tanh_dtype)
    score_ref[...] = score.astype(score_ref.dtype)


def _train_kernel(x_ref, lbl_ref, wp_ref, bp_ref, wr_ref, br_ref, loss_ref, *,
                  tanh_dtype):
    score = _pooler_rank_score(x_ref, wp_ref, bp_ref, wr_ref, br_ref,
                               tanh_dtype=tanh_dtype)
    # F.binary_cross_entropy_with_logits per-element (stable form); the 'sum'
    # reduction over the real (unpadded) batch happens in the wrapper.
    y = lbl_ref[...].astype(jnp.float32)
    loss_ref[...] = (jnp.maximum(score, 0.0) - score * y
                     + jnp.log1p(jnp.exp(-jnp.abs(score))))


def rr_model_forward(hidden_states, params, label=None, training=False,
                     compute_dtype=jnp.bfloat16, batch_tile=1024,
                     tanh_dtype=jnp.float32):
    """Mirrors RRModel.forward (electra branch) on the encoder output."""
    B, S, H = hidden_states.shape

    # First-token slice + compute-dtype cast. With allow_input_fusion below,
    # a jitted caller lets XLA fuse this producer into the pallas_call instead
    # of materializing an extra (B, H) HBM pass.
    first_tok = _maybe_cast(hidden_states[:, 0, :], compute_dtype)    # (B, H)
    w_pool = _maybe_cast(params["w_pool"], compute_dtype)             # (H, H)
    b_pool = _maybe_cast(params["b_pool"], jnp.float32)               # (1, H)
    w_rank = _maybe_cast(params["w_rank"], jnp.float32)               # (1, H)
    b_rank = _maybe_cast(params["b_rank"], jnp.float32)               # (1, 1)

    # --- batch tile selection -------------------------------------------------
    if B > batch_tile:
        bt = batch_tile
    elif B >= 512:
        # Guarantee >= 2 grid blocks so the "parallel" axis can shard across
        # v7x's two TensorCores; harmless (one extra ~0.35 us step) elsewhere.
        bt = _round_up(-(-B // 2), 8)
    else:
        bt = B                    # single full-array block (any size is legal)
    if bt < B:
        bt = _round_up(bt, 8)     # Mosaic (8,128) sublane-alignment guard
    n_blk = -(-B // bt)
    b_pad = n_blk * bt
    if b_pad != B:
        first_tok = jnp.pad(first_tok, ((0, b_pad - B), (0, 0)))

    x_spec = pl.BlockSpec((bt, H), lambda i: (i, 0))
    w_specs = [
        pl.BlockSpec((H, H), lambda i: (0, 0)),   # w_pool resident across grid
        pl.BlockSpec((1, H), lambda i: (0, 0)),   # b_pool
        pl.BlockSpec((1, H), lambda i: (0, 0)),   # w_rank
        pl.BlockSpec((1, 1), lambda i: (0, 0)),   # b_rank
    ]
    out_spec = pl.BlockSpec((bt, 1), lambda i: (i, 0))

    isz = jnp.dtype(compute_dtype).itemsize
    cost = pl.CostEstimate(
        flops=2 * b_pad * H * H + 4 * b_pad * H,
        transcendentals=b_pad * H + (2 * b_pad if training else 0),
        bytes_accessed=(b_pad * H * isz + H * H * isz + (2 * H + 1) * 4
                        + b_pad * 4 * (2 if training else 1)),
    )

    if not training:
        cparams = pltpu.CompilerParams(
            dimension_semantics=("parallel",),
            allow_input_fusion=[True, False, False, False, False])
        score = pl.pallas_call(
            functools.partial(_infer_kernel, tanh_dtype=tanh_dtype),
            grid=(n_blk,),
            in_specs=[x_spec] + w_specs,
            out_specs=out_spec,
            out_shape=jax.ShapeDtypeStruct((b_pad, 1), jnp.float32),
            compiler_params=cparams,
            cost_estimate=cost,
        )(first_tok, w_pool, b_pool, w_rank, b_rank)
        return {"rank_score": score[:B]}

    assert label is not None, "training path needs labels"
    lbl = label.astype(jnp.float32).reshape(B, 1)
    if b_pad != B:
        lbl = jnp.pad(lbl, ((0, b_pad - B), (0, 0)))

    cparams = pltpu.CompilerParams(
        dimension_semantics=("parallel",),
        allow_input_fusion=[True, True, False, False, False, False])
    per_sample = pl.pallas_call(
        functools.partial(_train_kernel, tanh_dtype=tanh_dtype),
        grid=(n_blk,),
        in_specs=[x_spec, pl.BlockSpec((bt, 1), lambda i: (i, 0))] + w_specs,
        out_specs=out_spec,
        out_shape=jax.ShapeDtypeStruct((b_pad, 1), jnp.float32),
        compiler_params=cparams,
        cost_estimate=cost,
    )(first_tok, lbl, w_pool, b_pool, w_rank, b_rank)
    # reduction='sum' over the real batch; rank_loss.unsqueeze(0) -> shape (1,)
    return jnp.sum(per_sample[:B]).reshape(1)


def init_params(key, hidden_size, compute_dtype=jnp.bfloat16):
    """Weights are emitted directly in their kernel dtypes (no per-call cast)."""
    k1, k2, k3, k4 = jax.random.split(key, 4)
    scale = 1.0 / jnp.sqrt(jnp.float32(hidden_size))
    return {
        # BertPooler.dense: Linear(H, H); stored as (in, out) -> y = x @ W + b
        "w_pool": (jax.random.normal(k1, (hidden_size, hidden_size), jnp.float32)
                   * scale).astype(compute_dtype),
        "b_pool": jax.random.normal(k2, (1, hidden_size), jnp.float32) * 0.01,
        # RRModel.rank: Linear(H, 1); stored as a (1, H) row for the VPU reduce
        "w_rank": jax.random.normal(k3, (1, hidden_size), jnp.float32) * scale,
        "b_rank": jax.random.normal(k4, (1, 1), jnp.float32) * 0.01,
    }


if __name__ == "__main__":
    B, S, H = 2, 8, 32   # toy shapes; production BERT H=768/1024 is lane-aligned
    key = jax.random.PRNGKey(0)
    k_hs, k_lbl, k_par = jax.random.split(key, 3)

    # encoder sequence_output stand-in (B, S, H)
    hidden_states = jax.random.normal(k_hs, (B, S, H), jnp.float32)
    # rank targets in {0, 1}, shape (B, 1) to match rank_score
    label = jax.random.bernoulli(k_lbl, 0.5, (B, 1)).astype(jnp.float32)

    params = init_params(k_par, H)

    # jit the wrappers so the allow_input_fusion path (slice/cast/pad fused
    # into the pallas_call operands) is actually exercised.
    infer_fn = jax.jit(functools.partial(rr_model_forward, training=False))
    train_fn = jax.jit(functools.partial(rr_model_forward, training=True))

    # inference path (no label DMA, no loss output)
    out = infer_fn(hidden_states, params)
    rank_score = jax.block_until_ready(out["rank_score"])

    # training path (BCE-with-logits sum loss, unsqueezed to shape (1,))
    rank_loss = jax.block_until_ready(train_fn(hidden_states, params, label))

    # plain-JAX reference with the same bf16 compute path as the kernel
    ft_bf = hidden_states[:, 0, :].astype(jnp.bfloat16)
    pooled_ref = jnp.tanh(
        jnp.dot(ft_bf, params["w_pool"], preferred_element_type=jnp.float32)
        + params["b_pool"])
    score_ref = (jnp.sum(pooled_ref * params["w_rank"], axis=-1, keepdims=True)
                 + params["b_rank"])
    loss_ref = jnp.sum(jnp.maximum(score_ref, 0.0) - score_ref * label
                       + jnp.log1p(jnp.exp(-jnp.abs(score_ref))))

    assert rank_score.shape == (B, 1) and rank_loss.shape == (1,)
    assert jnp.allclose(rank_score, score_ref, atol=2e-3, rtol=2e-3)
    assert jnp.allclose(rank_loss[0], loss_ref, atol=2e-3, rtol=2e-3)

    print("KERNEL_OK")
</pallas_src>

<mosaic_0001>
module attributes {stable_mosaic.version = 11 : i64} {
  func.func @_infer_kernel(%arg0: i32, %arg1: memref<2x32xbf16, #tpu.memory_space<vmem>>, %arg2: memref<32x32xbf16, #tpu.memory_space<vmem>>, %arg3: memref<1x32xf32, #tpu.memory_space<vmem>>, %arg4: memref<1x32xf32, #tpu.memory_space<vmem>>, %arg5: memref<1x1xf32, #tpu.memory_space<vmem>>, %arg6: memref<2x1xf32, #tpu.memory_space<vmem>>) attributes {dimension_semantics = [#tpu.dimension_semantics<parallel>], iteration_bounds = array<i64: 1>, scalar_prefetch = 0 : i64, scratch_operands = 0 : i64, tpu.core_type = #tpu.core_type<tc>, window_params = [{transform_indices = @transform_0, window_bounds = array<i64: 2, 32>}, {pipeline_mode = #tpu.pipeline_mode<synchronous>, transform_indices = @transform_1, window_bounds = array<i64: 32, 32>}, {pipeline_mode = #tpu.pipeline_mode<synchronous>, transform_indices = @transform_2, window_bounds = array<i64: 1, 32>}, {pipeline_mode = #tpu.pipeline_mode<synchronous>, transform_indices = @transform_3, window_bounds = array<i64: 1, 32>}, {pipeline_mode = #tpu.pipeline_mode<synchronous>, transform_indices = @transform_4, window_bounds = array<i64: 1, 1>}, {transform_indices = @transform_5, window_bounds = array<i64: 2, 1>}]} {
    %c0 = arith.constant 0 : index
    %c0_0 = arith.constant 0 : index
    %0 = vector.load %arg1[%c0, %c0_0] : memref<2x32xbf16, #tpu.memory_space<vmem>>, vector<2x32xbf16>
    %c0_1 = arith.constant 0 : index
    %c0_2 = arith.constant 0 : index
    %1 = vector.load %arg2[%c0_1, %c0_2] : memref<32x32xbf16, #tpu.memory_space<vmem>>, vector<32x32xbf16>
    %cst = arith.constant dense<0.000000e+00> : vector<2x32xf32>
    %2 = tpu.matmul %0, %1, %cst {dimension_numbers = #tpu.dot_dimension_numbers<[1], [0], [0], [1], [0, 0, 1, 1], [], []>} : vector<2x32xbf16>, vector<32x32xbf16>, vector<2x32xf32> -> vector<2x32xf32>
    %c0_3 = arith.constant 0 : index
    %c0_4 = arith.constant 0 : index
    %3 = vector.load %arg3[%c0_3, %c0_4] : memref<1x32xf32, #tpu.memory_space<vmem>>, vector<1x32xf32>
    %4 = vector.broadcast %3 : vector<1x32xf32> to vector<2x32xf32>
    %5 = arith.addf %2, %4 : vector<2x32xf32>
    %6 = math.tanh %5 : vector<2x32xf32>
    %c0_5 = arith.constant 0 : index
    %c0_6 = arith.constant 0 : index
    %7 = vector.load %arg4[%c0_5, %c0_6] : memref<1x32xf32, #tpu.memory_space<vmem>>, vector<1x32xf32>
    %8 = vector.broadcast %7 : vector<1x32xf32> to vector<2x32xf32>
    %9 = arith.mulf %6, %8 : vector<2x32xf32>
    %cst_7 = arith.constant dense<0.000000e+00> : vector<2xf32>
    %10 = vector.multi_reduction <add>, %9, %cst_7 [1] : vector<2x32xf32> to vector<2xf32>
    %11 = vector.shape_cast %10 : vector<2xf32> to vector<2x1xf32>
    %c0_8 = arith.constant 0 : index
    %c0_9 = arith.constant 0 : index
    %12 = vector.load %arg5[%c0_8, %c0_9] : memref<1x1xf32, #tpu.memory_space<vmem>>, vector<1x1xf32>
    %13 = vector.broadcast %12 : vector<1x1xf32> to vector<2x1xf32>
    %14 = arith.addf %11, %13 : vector<2x1xf32>
    %c0_10 = arith.constant 0 : index
    %c0_11 = arith.constant 0 : index
    %15 = vector.load %arg6[%c0_10, %c0_11] : memref<2x1xf32, #tpu.memory_space<vmem>>, vector<2x1xf32>
    tpu.vector_store %arg6[%c0_10, %c0_11], %14 {strides = array<i32>} : memref<2x1xf32, #tpu.memory_space<vmem>>, vector<2x1xf32>,
    return
  }
  func.func @transform_0(%arg0: i32) -> (i32, i32) {
    %c0_i32 = arith.constant 0 : i32
    %c0_i32_0 = arith.constant 0 : i32
    return %arg0, %c0_i32 : i32, i32
  }
  func.func @transform_1(%arg0: i32) -> (i32, i32) {
    %c0_i32 = arith.constant 0 : i32
    %c0_i32_0 = arith.constant 0 : i32
    %c0_i32_1 = arith.constant 0 : i32
    return %c0_i32, %c0_i32_0 : i32, i32
  }
  func.func @transform_2(%arg0: i32) -> (i32, i32) {
    %c0_i32 = arith.constant 0 : i32
    %c0_i32_0 = arith.constant 0 : i32
    %c0_i32_1 = arith.constant 0 : i32
    return %c0_i32, %c0_i32_0 : i32, i32
  }
  func.func @transform_3(%arg0: i32) -> (i32, i32) {
    %c0_i32 = arith.constant 0 : i32
    %c0_i32_0 = arith.constant 0 : i32
    %c0_i32_1 = arith.constant 0 : i32
    return %c0_i32, %c0_i32_0 : i32, i32
  }
  func.func @transform_4(%arg0: i32) -> (i32, i32) {
    %c0_i32 = arith.constant 0 : i32
    %c0_i32_0 = arith.constant 0 : i32
    %c0_i32_1 = arith.constant 0 : i32
    return %c0_i32, %c0_i32_0 : i32, i32
  }
  func.func @transform_5(%arg0: i32) -> (i32, i32) {
    %c0_i32 = arith.constant 0 : i32
    %c0_i32_0 = arith.constant 0 : i32
    return %arg0, %c0_i32 : i32, i32
  }
}

</mosaic_0001>

<llo_original>
// kernel: rr_model_forward.2
$region0: #{rr_model_forward.2}
  #allocation0 [shape = 'u32[]', space=smem, size = 0x4, offset = 0x4, fixed_abs, tag = 'smem constant byte address 0x4 - core index']
  #allocation1 [shape = 'u32[144,128]{1,0:T(1,128)}', space=vmem, size = 0x12000, scoped, tag = 'internal scratch']
  #allocation2 [shape = 'f32[1,1]{1,0:T(1,128)S(1)}', space=vmem, size = 0x200, scoped, tag = 'scoped memory for rr_model_forward.2']
  %s0 = inlined_call_operand.vmem [shape: bf16[32,32], index: 0, kind: input, shape index: {}]
  %s1 = inlined_call_operand.vmem [shape: f32[1,32], index: 1, kind: input, shape index: {}]
  %s2 = inlined_call_operand.vmem [shape: f32[1,32], index: 2, kind: input, shape index: {}]
  %s3 = inlined_call_operand.<no memory space> [shape: f32[1,1], index: 3, kind: input, shape index: {}]
  %s4 = inlined_call_operand.vmem [shape: bf16[2,1,32], index: 4, kind: input, shape index: {}]
  %s5 = inlined_call_operand.vmem [shape: f32[2,1], index: 5, kind: output, shape index: {}]
  %s6 = sld [smem:[#allocation0]]
  $region30: #{rr_model_forward.2} parent=0
    _
  %s8 = ssub.s32 1, %s6
  %s9 = scalar_select 0, %s8, %s6
  %v10 = vstv %s3
  %11 = vst [vmem:[#allocation2] sm:$0x1] %v10
  $region1: #{rr_model_forward.2} parent=0
    #allocation3 [shape = 'u8[512]{0}', space=vmem, size = 0x400, dematerialized = true, scoped, tag = 'FusionAdapter Buffer %fusion.1 = bf16[2,32]{1,0:T(2,128)(2,1)} fusion(%param_4.1), kind=kLoop, calls=%fused_computation.2.clone']
    // Predicated region
    $region2: #{rr_model_forward.2} parent=1 // pred_check
      _
    $region3: #{rr_model_forward.2} parent=1 // pred_check_branch
      %13 = sbr.rel (0) target = $region5
    $region4: #{rr_model_forward.2} parent=1 // pred_region
      _
    $region5: #{rr_model_forward.2} parent=1 // pred_fallthru
      _
    // Predicated region
    $region6: #{rr_model_forward.2} parent=1 // pred_check
      _
    $region7: #{rr_model_forward.2} parent=1 // pred_check_branch
      %15 = sbr.rel (0) target = $region9
    $region8: #{rr_model_forward.2} parent=1 // pred_region
      _
    $region9: #{rr_model_forward.2} parent=1 // pred_fallthru
      _
    // Predicated region
    $region10: #{rr_model_forward.2} parent=1 // pred_check
      _
    $region11: #{rr_model_forward.2} parent=1 // pred_check_branch
      %17 = sbr.rel (0) target = $region13
    $region12: #{rr_model_forward.2} parent=1 // pred_region
      _
    $region13: #{rr_model_forward.2} parent=1 // pred_fallthru
      _
    // Predicated region
    $region14: #{rr_model_forward.2} parent=1 // pred_check
      _
    $region15: #{rr_model_forward.2} parent=1 // pred_check_branch
      %19 = sbr.rel (0) target = $region17
    $region16: #{rr_model_forward.2} parent=1 // pred_region
      _
    $region17: #{rr_model_forward.2} parent=1 // pred_fallthru
      _
    // Predicated region
    $region18: #{rr_model_forward.2} parent=1 // pred_check
      _
    $region19: #{rr_model_forward.2} parent=1 // pred_check_branch
      %21 = sbr.rel (0) target = $region21
    $region20: #{rr_model_forward.2} parent=1 // pred_region
      _
    $region21: #{rr_model_forward.2} parent=1 // pred_fallthru
      _
    %s23 = sor.u32 3, 1
    %s24 = sand.u32 %s23, 1
    %v25 = vld [vmem:[%s4] sm:%s24]
    %v26 = vunpack.c.l.bf16 %v25
    %v27 = vunpack.c.h.bf16 %v25
    %v28 = vpack.c.bf16 0.0, %v26
    %30 = vst [vmem:[#allocation3] sm:$0x1] %v28
    %v32 = vld [vmem:[#allocation3] sm:$0x1]
    %v33 = vld [vmem:[%s0] sm:$0xf]
    %v34 = vld [vmem:[%s0 + $0x4] sm:$0xf]
    %v35 = vld [vmem:[%s0 + $0x8] sm:$0xf]
    %v36 = vld [vmem:[%s0 + $0xc] sm:$0xf]
    %v37 = vld [vmem:[%s1] sm:$0x1]
    %v39 = vlaneseq
    %v40 = vshrl.u32 %v39, 7
    %v41 = vsub.s32 0, %v40
    %v42 = vrot.slane %v37, %v41
    %v48 = vunpack.c.l.b16 %v33
    %v49 = vunpack.c.l.b16 %v34
    %v50 = vunpack.c.l.b16 %v35
    %v51 = vunpack.c.l.b16 %v36
    %v52 = vpack.c.b16 %v49, %v48
    %v53 = vpack.c.b16 %v51, %v50
    %vm56 = vcmask 261120
    %v58 = vsel %vm56, %v32, 0
    %60 = vmatprep.subr.bf16.mxu0 0
    %61 = vmatpush1.bf16.msra.mxu0 %v52
    %62 = vmatprep.subr.bf16.mxu0 0
    %63 = vmatpush1.bf16.msra.mxu0 %v53
    %64 = vmatprep.subr.bf16.mxu0 0
    %65 = vmatpush1.bf16.msra.mxu0 0
    %66 = vmatprep.subr.bf16.mxu0 0
    %67 = vmatpush1.bf16.msra.mxu0 0
    %68 = vmatprep.subr.bf16.mxu0 0
    %69 = vmatpush1.bf16.msra.mxu0 0
    %70 = vmatprep.subr.bf16.mxu0 0
    %71 = vmatpush1.bf16.msra.mxu0 0
    %72 = vmatprep.subr.bf16.mxu0 0
    %73 = vmatpush1.bf16.msra.mxu0 0
    %74 = vmatprep.subr.bf16.mxu0 0
    %75 = vmatpush1.bf16.msra.mxu0 0
    %76 = vmatprep.subr.bf16.mxu0 0
    %77 = vmatpush1.bf16.msra.mxu0 0
    %78 = vmatprep.subr.bf16.mxu0 0
    %79 = vmatpush1.bf16.msra.mxu0 0
    %80 = vmatprep.subr.bf16.mxu0 0
    %81 = vmatpush1.bf16.msra.mxu0 0
    %82 = vmatprep.subr.bf16.mxu0 0
    %83 = vmatpush1.bf16.msra.mxu0 0
    %84 = vmatprep.subr.bf16.mxu0 0
    %85 = vmatpush1.bf16.msra.mxu0 0
    %86 = vmatprep.subr.bf16.mxu0 0
    %87 = vmatpush1.bf16.msra.mxu0 0
    %88 = vmatprep.subr.bf16.mxu0 0
    %89 = vmatpush1.bf16.msra.mxu0 0
    %90 = vmatprep.subr.bf16.mxu0 0
    %91 = vmatpush1.bf16.msra.mxu0 0
    %92 = vmatprep.mubr.bf16.mxu0 0
    %93 = vmatmul.mubr.bf16.gmra.mrb[0].mxu0 %v58
    %v94 = vpop.f32.mrb[0].mxu0
    %v95 = vadd.f32 %v42, %v94
    %v96 = vpop.f32.mrb[0].mxu0
    %v97 = vpop.f32.mrb[0].mxu0
    %v98 = vpop.f32.mrb[0].mxu0
    %99 = vdwg.mxu0
    %v100 = vtanh.pop %v95
    %v101 = vld [vmem:[%s2] sm:$0x1]
    %v103 = vlaneseq
    %v104 = vshrl.u32 %v103, 7
    %v105 = vsub.s32 0, %v104
    %v106 = vrot.slane %v101, %v105
    %v108 = vmul.f32 %v100, %v106
    %vm109 = vcmask 254976
    %v110 = vsel %vm109, %v108, 0.0
    %111 = vadd.xlane.f32.xlu0 %v110
    %v112 = vpop.xlane.xlu0 %111
    %v113 = vld [vmem:[#allocation2] sm:$0x1]
    %v115 = vlaneseq
    %v116 = vshrl.u32 %v115, 7
    %v117 = vsub.s32 0, %v116
    %v118 = vrot.slane %v113, %v117
    %v120 = vadd.f32 %v112, %v118
    %vm121 = vcmask 1024
    %122 = vst.msk [vmem:[%s5] sm:$0x3] %vm121, %v120
    // Predicated region
    $region22: #{rr_model_forward.2} parent=1 // pred_check
      _
    $region23: #{rr_model_forward.2} parent=1 // pred_check_branch
      %124 = sbr.rel (0) target = $region25
    $region24: #{rr_model_forward.2} parent=1 // pred_region
      _
    $region25: #{rr_model_forward.2} parent=1 // pred_fallthru
      _
    // Predicated region
    $region26: #{rr_model_forward.2} parent=1 // pred_check
      _
    $region27: #{rr_model_forward.2} parent=1 // pred_check_branch
      %126 = sbr.rel (0) target = $region29
    $region28: #{rr_model_forward.2} parent=1 // pred_region
      _
    $region29: #{rr_model_forward.2} parent=1 // pred_fallthru
      _

</llo_original>
